<compile_context>
chip_gen: v7x
topology: tpu7x:2x2x1
jax: 0.10.0
libtpu: 0.0.40
codegen_flags: <defaults>
</compile_context>

<pallas_src>
import jax
import jax.numpy as jnp
from jax.experimental import pallas as pl
from jax.experimental.pallas import tpu as pltpu


def _rup(x, m):
    return ((x + m - 1) // m) * m


def _make_kernel(T, E, KB, off):
    """Builds the fused kernel; `off` holds static row offsets into the aux slab
    (keys: c, dec, kbm, last) and the weight column (keys: bkb, wgx, wgkb)."""

    def kernel(enc_ref, kbavg_ref, aux_ref, wkb_ref, wcol_ref, scal_ref,
               sent_ref, kbcos_ref):
        # ---- weighted context over the sequence (reduce over leading T) ------
        enc = enc_ref[...]                                    # (T, E, BB)
        c = aux_ref[off["c"]:off["c"] + T, :]                 # (T, BB)
        ctx = jnp.sum(c[:, None, :] * enc, axis=0)            # (E, BB)
        den = jnp.sum(c, axis=0, keepdims=True)               # (1, BB)
        ctx = ctx * pl.reciprocal(den + 1e-10)                # exact reciprocal

        # ---- cosine similarity context <-> averaged kb triples ---------------
        kbavg = kbavg_ref[...]                                # (E, KB, BB)
        dotp = jnp.sum(ctx[:, None, :] * kbavg, axis=0)       # (KB, BB)
        kb_sq = jnp.sum(kbavg * kbavg, axis=0)                # (KB, BB)
        ctx_sq = jnp.sum(ctx * ctx, axis=0, keepdims=True)    # (1, BB)
        eps = 1e-8                                            # torch per-norm clamp
        denom = (jnp.maximum(jnp.sqrt(ctx_sq), eps)
                 * jnp.maximum(jnp.sqrt(kb_sq), eps))         # (KB, BB)
        cos = dotp / denom

        # ---- kb_cosine = out_kb(sigmoid(cos)) * kb_mask -----------------------
        sig = jax.nn.sigmoid(cos)                             # (KB, BB)
        kb_lin = jnp.dot(wkb_ref[...], sig,
                         preferred_element_type=jnp.float32)  # (KB, BB) lane-dense
        bkb = wcol_ref[off["bkb"]:off["bkb"] + KB, :]         # (KB, 1)
        kbm = aux_ref[off["kbm"]:off["kbm"] + KB, :]          # (KB, BB)
        kb_cos = (kb_lin + bkb) * kbm
        kbcos_ref[...] = kb_cos.astype(kbcos_ref.dtype)

        # ---- sentinel gate without materializing the concat -------------------
        dec = aux_ref[off["dec"]:off["dec"] + E, :]           # (E, BB)
        last = aux_ref[off["last"]:off["last"] + 1, :]        # (1, BB)
        wgx = wcol_ref[off["wgx"]:off["wgx"] + E, :]          # (E, 1)
        wgkb = wcol_ref[off["wgkb"]:off["wgkb"] + KB, :]      # (KB, 1)
        w_s = scal_ref[0]                                     # gate weight for last
        b_g = scal_ref[1]                                     # gate bias
        sent = (jnp.sum((ctx + dec) * wgx, axis=0, keepdims=True)
                + jnp.sum(kb_cos * wgkb, axis=0, keepdims=True)
                + last * w_s + b_g)                           # (1, BB)
        sent_ref[...] = sent.astype(sent_ref.dtype)

    return kernel


def sentient_attention_forward(input_b, input_c, inp_mask, decoder_out, kb,
                               kb_mask, last_sentient, params, *,
                               batch_block=512):
    """input_b:(T,B) ids, input_c:(T,B) f32, decoder_out:(B,) ids,
    kb:(B,KB,NT) ids, kb_mask:(B,KB) f32, last_sentient:(B,) f32.
    Returns (sentient (B,1), kb_cosine (B,KB))."""
    del inp_mask                                       # unused by the forward
    emb = params["embedding"].astype(jnp.float32)      # (V, E)
    T, B = input_b.shape
    KB = kb.shape[1]
    E = emb.shape[1]

    # --- irregular gathers hoisted to XLA, emitted directly batch-in-lanes ---
    enc = jnp.transpose(jnp.take(emb, input_b, axis=0), (0, 2, 1))     # (T, E, B)
    dec = jnp.transpose(jnp.take(emb, decoder_out, axis=0), (1, 0))    # (E, B)
    kb_avg = jnp.mean(jnp.take(emb, kb, axis=0), axis=2)               # (B, KB, E)
    kb_avg = jnp.transpose(kb_avg, (2, 1, 0))                          # (E, KB, B)
    c = input_c.astype(jnp.float32)                                    # (T, B)
    kbm = kb_mask.astype(jnp.float32).T                                # (KB, B)
    last = last_sentient.astype(jnp.float32)                           # (B,)

    # --- batch lives on the 128-lane axis; pick block / padded size ----------
    BB = max(128, min(_rup(batch_block, 128), _rup(B, 128)))
    Bp = _rup(B, BB)
    grid = Bp // BB

    def pad_lanes(x):
        if x.shape[-1] == Bp:
            return x
        cfg = [(0, 0)] * (x.ndim - 1) + [(0, Bp - x.shape[-1])]
        return jnp.pad(x, cfg)

    enc_p, kbavg_p = pad_lanes(enc), pad_lanes(kb_avg)

    # --- coalesce all small per-batch operands into ONE lane-dense slab ------
    off = {"c": 0, "dec": _rup(T, 8)}
    off["kbm"] = off["dec"] + _rup(E, 8)
    off["last"] = off["kbm"] + _rup(KB, 8)
    aux_rows = off["last"] + 8
    aux = jnp.zeros((aux_rows, Bp), jnp.float32)
    aux = aux.at[off["c"]:off["c"] + T, :B].set(c)
    aux = aux.at[off["dec"]:off["dec"] + E, :B].set(dec)
    aux = aux.at[off["kbm"]:off["kbm"] + KB, :B].set(kbm)
    aux = aux.at[off["last"], :B].set(last)

    # --- weights: one resident (rows,1) column + (KB,KB) matrix + 2 scalars ---
    w_g = params["sent_w"].astype(jnp.float32)[0]                      # (E+KB+1,)
    b_g = params["sent_b"].astype(jnp.float32)[0]
    off["bkb"] = 0
    off["wgx"] = _rup(KB, 8)
    off["wgkb"] = off["wgx"] + _rup(E, 8)
    wcol_rows = off["wgkb"] + _rup(KB, 8)
    wcol = jnp.zeros((wcol_rows, 1), jnp.float32)
    wcol = wcol.at[off["bkb"]:off["bkb"] + KB, 0].set(
        params["out_kb_b"].astype(jnp.float32))
    wcol = wcol.at[off["wgx"]:off["wgx"] + E, 0].set(w_g[:E])
    wcol = wcol.at[off["wgkb"]:off["wgkb"] + KB, 0].set(w_g[E:E + KB])
    scal = jnp.stack([w_g[E + KB], b_g])                               # (2,) SMEM
    wkb = params["out_kb_w"].astype(jnp.float32)                       # (KB, KB)

    kernel = _make_kernel(T, E, KB, off)

    sent, kb_cos = pl.pallas_call(
        kernel,
        out_shape=(jax.ShapeDtypeStruct((1, Bp), jnp.float32),
                   jax.ShapeDtypeStruct((KB, Bp), jnp.float32)),
        grid_spec=pltpu.PrefetchScalarGridSpec(
            num_scalar_prefetch=0,
            grid=(grid,),
            in_specs=[
                pl.BlockSpec((T, E, BB), lambda b: (0, 0, b)),     # encoder embs
                pl.BlockSpec((E, KB, BB), lambda b: (0, 0, b)),    # kb avg embs
                pl.BlockSpec((aux_rows, BB), lambda b: (0, b)),    # coalesced slab
                pl.BlockSpec((KB, KB), lambda b: (0, 0)),          # out_kb W (resident)
                pl.BlockSpec((wcol_rows, 1), lambda b: (0, 0)),    # bias/gate column
                pl.BlockSpec(memory_space=pltpu.MemorySpace.SMEM),  # [w_s, b_gate]
            ],
            out_specs=[
                pl.BlockSpec((1, BB), lambda b: (0, b)),
                pl.BlockSpec((KB, BB), lambda b: (0, b)),
            ]),
        compiler_params=pltpu.CompilerParams(
            dimension_semantics=("parallel",)),   # batch blocks are independent
    )(enc_p, kbavg_p, aux, wkb, wcol, scal)

    return sent.T[:B], kb_cos.T[:B]


def sentient_attention_reference(input_b, input_c, inp_mask, decoder_out, kb,
                                 kb_mask, last_sentient, params):
    """Pure-JAX mirror of the PyTorch forward (torch-style per-norm cosine clamp)."""
    del inp_mask
    emb = params["embedding"].astype(jnp.float32)
    enc = jnp.transpose(jnp.take(emb, input_b, axis=0), (1, 0, 2))     # (B, T, E)
    dec = jnp.take(emb, decoder_out, axis=0)                           # (B, E)
    c = jnp.transpose(input_c, (1, 0)).astype(jnp.float32)             # (B, T)
    ctx = jnp.einsum("bt,bte->be", c, enc)
    ctx = ctx / (jnp.sum(c, axis=1, keepdims=True) + 1e-10)
    kb_avg = jnp.mean(jnp.take(emb, kb, axis=0), axis=2)               # (B, KB, E)
    dotp = jnp.einsum("be,bke->bk", ctx, kb_avg)
    eps = 1e-8
    nrm = (jnp.maximum(jnp.linalg.norm(ctx, axis=-1, keepdims=True), eps)
           * jnp.maximum(jnp.linalg.norm(kb_avg, axis=-1), eps))
    cos = dotp / nrm
    kb_cos = (jax.nn.sigmoid(cos) @ params["out_kb_w"].T + params["out_kb_b"]) * kb_mask
    inp = jnp.concatenate([ctx + dec, kb_cos, last_sentient.reshape(-1, 1)], axis=-1)
    sent = inp @ params["sent_w"].T + params["sent_b"]
    return sent, kb_cos


def init_params(key, vocab_size, emb_dim, kb_size):
    k1, k2, k3, k4, k5 = jax.random.split(key, 5)
    emb = 0.1 * jax.random.normal(k1, (vocab_size, emb_dim), jnp.float32)
    emb = emb.at[0].set(0.0)                                   # padding_idx=0
    in_dim = emb_dim + kb_size + 1
    sent_w = jax.random.normal(k2, (1, in_dim), jnp.float32) * jnp.sqrt(2.0 / (in_dim + 1))
    sent_b = 0.01 * jax.random.normal(k3, (1,), jnp.float32)
    bound = 1.0 / jnp.sqrt(jnp.float32(kb_size))
    out_kb_w = jax.random.uniform(k4, (kb_size, kb_size), jnp.float32, -bound, bound)
    out_kb_b = jax.random.uniform(k5, (kb_size,), jnp.float32, -bound, bound)
    return {"embedding": emb, "sent_w": sent_w, "sent_b": sent_b,
            "out_kb_w": out_kb_w, "out_kb_b": out_kb_b}


if __name__ == "__main__":
    # Small shapes: seq T=8, batch B=4, emb E=32, kb_max_size KB=10, triple len NT=3, vocab V=50
    T, B, E, KB, NT, V = 8, 4, 32, 10, 3, 50

    key = jax.random.PRNGKey(0)
    kp, ktok, kc, kdec, kkb, kmask, ksent = jax.random.split(key, 7)
    params = init_params(kp, V, E, KB)

    input_b = jax.random.randint(ktok, (T, B), 1, V, dtype=jnp.int32)
    input_c = jax.nn.softmax(jax.random.normal(kc, (T, B)), axis=0).astype(jnp.float32)
    inp_mask = jnp.ones((T, B), jnp.float32)   # unused by the reference forward
    decoder_out = jax.random.randint(kdec, (B,), 1, V, dtype=jnp.int32)
    kb = jax.random.randint(kkb, (B, KB, NT), 1, V, dtype=jnp.int32)
    kb_mask = (jax.random.uniform(kmask, (B, KB)) > 0.3).astype(jnp.float32)
    last_sentient = jax.random.uniform(ksent, (B,), dtype=jnp.float32)

    sentient, kb_cosine = sentient_attention_forward(
        input_b, input_c, inp_mask, decoder_out, kb, kb_mask, last_sentient, params)
    jax.block_until_ready((sentient, kb_cosine))

    assert sentient.shape == (B, 1)
    assert kb_cosine.shape == (B, KB)

    ref_sent, ref_kb = sentient_attention_reference(
        input_b, input_c, inp_mask, decoder_out, kb, kb_mask, last_sentient, params)
    assert jnp.allclose(sentient, ref_sent, rtol=1e-4, atol=1e-5), "sentient mismatch"
    assert jnp.allclose(kb_cosine, ref_kb, rtol=1e-4, atol=1e-5), "kb_cosine mismatch"

    print("KERNEL_OK")
</pallas_src>

<mosaic_0001>
module attributes {stable_mosaic.version = 11 : i64} {
  func.func @kernel(%arg0: i32, %arg1: memref<8x32x128xf32, #tpu.memory_space<vmem>>, %arg2: memref<32x10x128xf32, #tpu.memory_space<vmem>>, %arg3: memref<64x128xf32, #tpu.memory_space<vmem>>, %arg4: memref<10x10xf32, #tpu.memory_space<vmem>>, %arg5: memref<64x1xf32, #tpu.memory_space<vmem>>, %arg6: memref<2xf32, #tpu.memory_space<smem>>, %arg7: memref<1x128xf32, #tpu.memory_space<vmem>>, %arg8: memref<10x128xf32, #tpu.memory_space<vmem>>) attributes {dimension_semantics = [#tpu.dimension_semantics<parallel>], iteration_bounds = array<i64: 1>, scalar_prefetch = 0 : i64, scratch_operands = 0 : i64, tpu.core_type = #tpu.core_type<tc>, window_params = [{transform_indices = @transform_0, window_bounds = array<i64: 8, 32, 128>}, {transform_indices = @transform_1, window_bounds = array<i64: 32, 10, 128>}, {transform_indices = @transform_2, window_bounds = array<i64: 64, 128>}, {pipeline_mode = #tpu.pipeline_mode<synchronous>, transform_indices = @transform_3, window_bounds = array<i64: 10, 10>}, {pipeline_mode = #tpu.pipeline_mode<synchronous>, transform_indices = @transform_4, window_bounds = array<i64: 64, 1>}, {transform_indices = @transform_5, window_bounds = array<i64: 2>}, {transform_indices = @transform_6, window_bounds = array<i64: 1, 128>}, {transform_indices = @transform_7, window_bounds = array<i64: 10, 128>}]} {
    %c0 = arith.constant 0 : index
    %c0_0 = arith.constant 0 : index
    %c0_1 = arith.constant 0 : index
    %0 = vector.load %arg1[%c0, %c0_0, %c0_1] : memref<8x32x128xf32, #tpu.memory_space<vmem>>, vector<8x32x128xf32>
    %c0_2 = arith.constant 0 : index
    %c0_3 = arith.constant 0 : index
    %1 = vector.load %arg3[%c0_2, %c0_3] : memref<64x128xf32, #tpu.memory_space<vmem>>, vector<8x128xf32>
    %2 = vector.shape_cast %1 : vector<8x128xf32> to vector<8x1x128xf32>
    %3 = vector.broadcast %2 : vector<8x1x128xf32> to vector<8x32x128xf32>
    %4 = arith.mulf %3, %0 : vector<8x32x128xf32>
    %cst = arith.constant dense<0.000000e+00> : vector<32x128xf32>
    %5 = vector.multi_reduction <add>, %4, %cst [0] : vector<8x32x128xf32> to vector<32x128xf32>
    %cst_4 = arith.constant dense<0.000000e+00> : vector<128xf32>
    %6 = vector.multi_reduction <add>, %1, %cst_4 [0] : vector<8x128xf32> to vector<128xf32>
    %7 = vector.shape_cast %6 : vector<128xf32> to vector<1x128xf32>
    %cst_5 = arith.constant 1.000000e-10 : f32
    %8 = vector.broadcast %cst_5 : f32 to vector<1x128xf32>
    %9 = arith.addf %7, %8 : vector<1x128xf32>
    %10 = tpu.reciprocal %9 : vector<1x128xf32> -> vector<1x128xf32>
    %11 = vector.broadcast %10 : vector<1x128xf32> to vector<32x128xf32>
    %12 = arith.mulf %5, %11 : vector<32x128xf32>
    %c0_6 = arith.constant 0 : index
    %c0_7 = arith.constant 0 : index
    %c0_8 = arith.constant 0 : index
    %13 = vector.load %arg2[%c0_6, %c0_7, %c0_8] : memref<32x10x128xf32, #tpu.memory_space<vmem>>, vector<32x10x128xf32>
    %14 = vector.shape_cast %12 : vector<32x128xf32> to vector<32x1x128xf32>
    %15 = vector.broadcast %14 : vector<32x1x128xf32> to vector<32x10x128xf32>
    %16 = arith.mulf %15, %13 : vector<32x10x128xf32>
    %cst_9 = arith.constant dense<0.000000e+00> : vector<10x128xf32>
    %17 = vector.multi_reduction <add>, %16, %cst_9 [0] : vector<32x10x128xf32> to vector<10x128xf32>
    %18 = arith.mulf %13, %13 : vector<32x10x128xf32>
    %cst_10 = arith.constant dense<0.000000e+00> : vector<10x128xf32>
    %19 = vector.multi_reduction <add>, %18, %cst_10 [0] : vector<32x10x128xf32> to vector<10x128xf32>
    %20 = arith.mulf %12, %12 : vector<32x128xf32>
    %cst_11 = arith.constant dense<0.000000e+00> : vector<128xf32>
    %21 = vector.multi_reduction <add>, %20, %cst_11 [0] : vector<32x128xf32> to vector<128xf32>
    %22 = vector.shape_cast %21 : vector<128xf32> to vector<1x128xf32>
    %23 = math.sqrt %22 : vector<1x128xf32>
    %cst_12 = arith.constant 9.99999993E-9 : f32
    %24 = vector.broadcast %cst_12 : f32 to vector<1x128xf32>
    %25 = arith.maximumf %23, %24 : vector<1x128xf32>
    %26 = math.sqrt %19 : vector<10x128xf32>
    %cst_13 = arith.constant 9.99999993E-9 : f32
    %27 = vector.broadcast %cst_13 : f32 to vector<10x128xf32>
    %28 = arith.maximumf %26, %27 : vector<10x128xf32>
    %29 = vector.broadcast %25 : vector<1x128xf32> to vector<10x128xf32>
    %30 = arith.mulf %29, %28 : vector<10x128xf32>
    %31 = arith.divf %17, %30 : vector<10x128xf32>
    %32 = arith.negf %31 : vector<10x128xf32>
    %33 = math.exp %32 : vector<10x128xf32>
    %cst_14 = arith.constant 1.000000e+00 : f32
    %34 = vector.broadcast %cst_14 : f32 to vector<10x128xf32>
    %35 = arith.addf %34, %33 : vector<10x128xf32>
    %36 = arith.divf %34, %35 : vector<10x128xf32>
    %c0_15 = arith.constant 0 : index
    %c0_16 = arith.constant 0 : index
    %37 = vector.load %arg4[%c0_15, %c0_16] : memref<10x10xf32, #tpu.memory_space<vmem>>, vector<10x10xf32>
    %cst_17 = arith.constant dense<0.000000e+00> : vector<10x128xf32>
    %38 = tpu.matmul %37, %36, %cst_17 {dimension_numbers = #tpu.dot_dimension_numbers<[1], [0], [0], [1], [0, 0, 1, 1], [], []>} : vector<10x10xf32>, vector<10x128xf32>, vector<10x128xf32> -> vector<10x128xf32>
    %c0_18 = arith.constant 0 : index
    %c0_19 = arith.constant 0 : index
    %39 = vector.load %arg5[%c0_18, %c0_19] : memref<64x1xf32, #tpu.memory_space<vmem>>, vector<10x1xf32>
    %c40 = arith.constant 40 : index
    %c0_20 = arith.constant 0 : index
    %40 = vector.load %arg3[%c40, %c0_20] : memref<64x128xf32, #tpu.memory_space<vmem>>, vector<10x128xf32>
    %41 = vector.broadcast %39 : vector<10x1xf32> to vector<10x128xf32>
    %42 = arith.addf %38, %41 : vector<10x128xf32>
    %43 = arith.mulf %42, %40 : vector<10x128xf32>
    %c0_21 = arith.constant 0 : index
    %c0_22 = arith.constant 0 : index
    %44 = vector.load %arg8[%c0_21, %c0_22] : memref<10x128xf32, #tpu.memory_space<vmem>>, vector<10x128xf32>
    tpu.vector_store %arg8[%c0_21, %c0_22], %43 {strides = array<i32>} : memref<10x128xf32, #tpu.memory_space<vmem>>, vector<10x128xf32>,
    %c8 = arith.constant 8 : index
    %c0_23 = arith.constant 0 : index
    %45 = vector.load %arg3[%c8, %c0_23] : memref<64x128xf32, #tpu.memory_space<vmem>>, vector<32x128xf32>
    %c56 = arith.constant 56 : index
    %c0_24 = arith.constant 0 : index
    %46 = vector.load %arg3[%c56, %c0_24] : memref<64x128xf32, #tpu.memory_space<vmem>>, vector<1x128xf32>
    %c16 = arith.constant 16 : index
    %c0_25 = arith.constant 0 : index
    %47 = vector.load %arg5[%c16, %c0_25] : memref<64x1xf32, #tpu.memory_space<vmem>>, vector<32x1xf32>
    %c48 = arith.constant 48 : index
    %c0_26 = arith.constant 0 : index
    %48 = vector.load %arg5[%c48, %c0_26] : memref<64x1xf32, #tpu.memory_space<vmem>>, vector<10x1xf32>
    %c0_27 = arith.constant 0 : index
    %49 = memref.load %arg6[%c0_27] : memref<2xf32, #tpu.memory_space<smem>>
    %c1 = arith.constant 1 : index
    %50 = memref.load %arg6[%c1] : memref<2xf32, #tpu.memory_space<smem>>
    %51 = arith.addf %12, %45 : vector<32x128xf32>
    %52 = vector.broadcast %47 : vector<32x1xf32> to vector<32x128xf32>
    %53 = arith.mulf %51, %52 : vector<32x128xf32>
    %cst_28 = arith.constant dense<0.000000e+00> : vector<128xf32>
    %54 = vector.multi_reduction <add>, %53, %cst_28 [0] : vector<32x128xf32> to vector<128xf32>
    %55 = vector.shape_cast %54 : vector<128xf32> to vector<1x128xf32>
    %56 = vector.broadcast %48 : vector<10x1xf32> to vector<10x128xf32>
    %57 = arith.mulf %43, %56 : vector<10x128xf32>
    %cst_29 = arith.constant dense<0.000000e+00> : vector<128xf32>
    %58 = vector.multi_reduction <add>, %57, %cst_29 [0] : vector<10x128xf32> to vector<128xf32>
    %59 = vector.shape_cast %58 : vector<128xf32> to vector<1x128xf32>
    %60 = arith.addf %55, %59 : vector<1x128xf32>
    %61 = vector.broadcast %49 : f32 to vector<1x128xf32>
    %62 = arith.mulf %46, %61 : vector<1x128xf32>
    %63 = arith.addf %60, %62 : vector<1x128xf32>
    %64 = vector.broadcast %50 : f32 to vector<1x128xf32>
    %65 = arith.addf %63, %64 : vector<1x128xf32>
    %c0_30 = arith.constant 0 : index
    %c0_31 = arith.constant 0 : index
    %66 = vector.load %arg7[%c0_30, %c0_31] : memref<1x128xf32, #tpu.memory_space<vmem>>, vector<1x128xf32>
    tpu.vector_store %arg7[%c0_30, %c0_31], %65 {strides = array<i32>} : memref<1x128xf32, #tpu.memory_space<vmem>>, vector<1x128xf32>,
    return
  }
  func.func @transform_0(%arg0: i32) -> (i32, i32, i32) {
    %c0_i32 = arith.constant 0 : i32
    %c0_i32_0 = arith.constant 0 : i32
    %c0_i32_1 = arith.constant 0 : i32
    return %c0_i32, %c0_i32_0, %arg0 : i32, i32, i32
  }
  func.func @transform_1(%arg0: i32) -> (i32, i32, i32) {
    %c0_i32 = arith.constant 0 : i32
    %c0_i32_0 = arith.constant 0 : i32
    %c0_i32_1 = arith.constant 0 : i32
    return %c0_i32, %c0_i32_0, %arg0 : i32, i32, i32
  }
  func.func @transform_2(%arg0: i32) -> (i32, i32) {
    %c0_i32 = arith.constant 0 : i32
    %c0_i32_0 = arith.constant 0 : i32
    return %c0_i32, %arg0 : i32, i32
  }
  func.func @transform_3(%arg0: i32) -> (i32, i32) {
    %c0_i32 = arith.constant 0 : i32
    %c0_i32_0 = arith.constant 0 : i32
    %c0_i32_1 = arith.constant 0 : i32
    return %c0_i32, %c0_i32_0 : i32, i32
  }
  func.func @transform_4(%arg0: i32) -> (i32, i32) {
    %c0_i32 = arith.constant 0 : i32
    %c0_i32_0 = arith.constant 0 : i32
    %c0_i32_1 = arith.constant 0 : i32
    return %c0_i32, %c0_i32_0 : i32, i32
  }
  func.func @transform_5(%arg0: i32) -> i32 {
    %c0_i32 = arith.constant 0 : i32
    %c0_i32_0 = arith.constant 0 : i32
    return %c0_i32 : i32
  }
  func.func @transform_6(%arg0: i32) -> (i32, i32) {
    %c0_i32 = arith.constant 0 : i32
    %c0_i32_0 = arith.constant 0 : i32
    return %c0_i32, %arg0 : i32, i32
  }
  func.func @transform_7(%arg0: i32) -> (i32, i32) {
    %c0_i32 = arith.constant 0 : i32
    %c0_i32_0 = arith.constant 0 : i32
    return %c0_i32, %arg0 : i32, i32
  }
}

</mosaic_0001>

<llo_original>
// kernel: tpu_custom_call.1
$region0: #{tpu_custom_call.1}
  #allocation0 [shape = 'u32[]', space=smem, size = 0x4, offset = 0x4, fixed_abs, tag = 'smem constant byte address 0x4 - core index']
  #allocation1 [shape = 'u32[144,128]{1,0:T(1,128)}', space=vmem, size = 0x12000, scoped, tag = 'internal scratch']
  %s0 = inlined_call_operand.vmem [shape: f32[8,32,128], index: 0, kind: input, shape index: {}]
  %s1 = inlined_call_operand.vmem [shape: f32[32,10,128], index: 1, kind: input, shape index: {}]
  %s2 = inlined_call_operand.vmem [shape: f32[64,128], index: 2, kind: input, shape index: {}]
  %s3 = inlined_call_operand.vmem [shape: f32[10,10], index: 3, kind: input, shape index: {}]
  %s4 = inlined_call_operand.vmem [shape: f32[64,1], index: 4, kind: input, shape index: {}]
  %s5 = inlined_call_operand.vmem [shape: f32[2], index: 5, kind: input, shape index: {}]
  %s6 = inlined_call_operand.hbm [shape: f32[1,128], index: 6, kind: output, shape index: {0}]
  %s7 = inlined_call_operand.hbm [shape: f32[10,128], index: 7, kind: output, shape index: {1}]
  %8 = xla_tuple %s6, %s7
  %s9 = sld [smem:[#allocation0]]
  $region46: #{tpu_custom_call.1} parent=0
    _
  %s11 = ssub.s32 1, %s9
  %s12 = scalar_select 0, %s11, %s9
  $region1: #{tpu_custom_call.1} parent=0
    #allocation2 [shape = 'u8[512]{0}', space=smem, size = 0x200, scoped, tag = 'input window, operand 5, single buffered']
    #allocation3 [shape = 's32[1]{0}', space=sflag, size = 0x4, scoped, tag = 'scoped memory for tpu_custom_call.1']
    #allocation4 [shape = 's32[1]{0}', space=sflag, size = 0x4, scoped, tag = 'scoped memory for tpu_custom_call.1']
    #allocation5 [shape = 'u8[512]{0}', space=vmem, size = 0x400, scoped, tag = 'output window, operand 0, single buffered']
    #allocation6 [shape = 'u8[8192]{0}', space=vmem, size = 0x2000, scoped, tag = 'output window, operand 1, single buffered']
    #allocation7 [shape = 's32[1]{0}', space=sflag, size = 0x4, scoped, tag = 'scoped memory for tpu_custom_call.1']
    %13 = vsyncpa [#allocation4], 0
    %14 = vsyncpa [#allocation3], 0
    %15 = vsyncpa [#allocation7], 0
    // Predicated region
    $region2: #{tpu_custom_call.1} parent=1 // pred_check
      _
    $region3: #{tpu_custom_call.1} parent=1 // pred_check_branch
      %17 = sbr.rel (0) target = $region5
    $region4: #{tpu_custom_call.1} parent=1 // pred_region
      _
    $region5: #{tpu_custom_call.1} parent=1 // pred_fallthru
      _
    // Predicated region
    $region6: #{tpu_custom_call.1} parent=1 // pred_check
      _
    $region7: #{tpu_custom_call.1} parent=1 // pred_check_branch
      %19 = sbr.rel (0) target = $region9
    $region8: #{tpu_custom_call.1} parent=1 // pred_region
      _
    $region9: #{tpu_custom_call.1} parent=1 // pred_fallthru
      _
    // Predicated region
    $region10: #{tpu_custom_call.1} parent=1 // pred_check
      _
    $region11: #{tpu_custom_call.1} parent=1 // pred_check_branch
      %21 = sbr.rel (0) target = $region13
    $region12: #{tpu_custom_call.1} parent=1 // pred_region
      _
    $region13: #{tpu_custom_call.1} parent=1 // pred_fallthru
      _
    // Predicated region
    $region14: #{tpu_custom_call.1} parent=1 // pred_check
      _
    $region15: #{tpu_custom_call.1} parent=1 // pred_check_branch
      %23 = sbr.rel (0) target = $region17
    $region16: #{tpu_custom_call.1} parent=1 // pred_region
      _
    $region17: #{tpu_custom_call.1} parent=1 // pred_fallthru
      _
    // Predicated region
    $region18: #{tpu_custom_call.1} parent=1 // pred_check
      _
    $region19: #{tpu_custom_call.1} parent=1 // pred_check_branch
      %25 = sbr.rel (0) target = $region21
    $region20: #{tpu_custom_call.1} parent=1 // pred_region
      _
    $region21: #{tpu_custom_call.1} parent=1 // pred_fallthru
      _
    // Predicated region
    $region22: #{tpu_custom_call.1} parent=1 // pred_check
      _
    $region23: #{tpu_custom_call.1} parent=1 // pred_check_branch
      %27 = sbr.rel (0) target = $region25
    $region24: #{tpu_custom_call.1} parent=1 // pred_region
      %s29 = ssub.s32 16, 16
      %30 = vsyncadd [#allocation4], %s29
      %s32 = sshll.u32 %s5, 4
      %s33 = int_to_ptr.vmem [resolvable:$true] %s32
      %35 = dma.vmem_to_smem %s33, 16, [#allocation2], [#allocation4]
    $region25: #{tpu_custom_call.1} parent=1 // pred_fallthru
      _
    // Predicated region
    $region26: #{tpu_custom_call.1} parent=1 // pred_check
      _
    $region27: #{tpu_custom_call.1} parent=1 // pred_check_branch
      %37 = sbr.rel (0) target = $region29
    $region28: #{tpu_custom_call.1} parent=1 // pred_region
      %38 = dma.done [#allocation4], 16
    $region29: #{tpu_custom_call.1} parent=1 // pred_fallthru
      _
    %39 = sfence
    %v40 = vld [vmem:[%s0] sm:$0xff]
    %v41 = vld [vmem:[%s0 + $0x8] sm:$0xff]
    %v42 = vld [vmem:[%s0 + $0x10] sm:$0xff]
    %v43 = vld [vmem:[%s0 + $0x18] sm:$0xff]
    %v44 = vld [vmem:[%s0 + $0x20] sm:$0xff]
    %v45 = vld [vmem:[%s0 + $0x28] sm:$0xff]
    %v46 = vld [vmem:[%s0 + $0x30] sm:$0xff]
    %v47 = vld [vmem:[%s0 + $0x38] sm:$0xff]
    %v48 = vld [vmem:[%s0 + $0x40] sm:$0xff]
    %v49 = vld [vmem:[%s0 + $0x48] sm:$0xff]
    %v50 = vld [vmem:[%s0 + $0x50] sm:$0xff]
    %v51 = vld [vmem:[%s0 + $0x58] sm:$0xff]
    %v52 = vld [vmem:[%s0 + $0x60] sm:$0xff]
    %v53 = vld [vmem:[%s0 + $0x68] sm:$0xff]
    %v54 = vld [vmem:[%s0 + $0x70] sm:$0xff]
    %v55 = vld [vmem:[%s0 + $0x78] sm:$0xff]
    %v56 = vld [vmem:[%s0 + $0x80] sm:$0xff]
    %v57 = vld [vmem:[%s0 + $0x88] sm:$0xff]
    %v58 = vld [vmem:[%s0 + $0x90] sm:$0xff]
    %v59 = vld [vmem:[%s0 + $0x98] sm:$0xff]
    %v60 = vld [vmem:[%s0 + $0xa0] sm:$0xff]
    %v61 = vld [vmem:[%s0 + $0xa8] sm:$0xff]
    %v62 = vld [vmem:[%s0 + $0xb0] sm:$0xff]
    %v63 = vld [vmem:[%s0 + $0xb8] sm:$0xff]
    %v64 = vld [vmem:[%s0 + $0xc0] sm:$0xff]
    %v65 = vld [vmem:[%s0 + $0xc8] sm:$0xff]
    %v66 = vld [vmem:[%s0 + $0xd0] sm:$0xff]
    %v67 = vld [vmem:[%s0 + $0xd8] sm:$0xff]
    %v68 = vld [vmem:[%s0 + $0xe0] sm:$0xff]
    %v69 = vld [vmem:[%s0 + $0xe8] sm:$0xff]
    %v70 = vld [vmem:[%s0 + $0xf0] sm:$0xff]
    %v71 = vld [vmem:[%s0 + $0xf8] sm:$0xff]
    %v72 = vld [vmem:[%s2] sm:$0xff]
    %v74 = vcombine.high %v72, %v72
    %v76 = vunpack.c.l.s4 1966171168
    %v77 = vunpack.c.0.s8 %v76
    %v78 = vlaneseq
    %v79 = vshrl.u32 %v78, 7
    %v80 = vsub.s32 %v77, %v79
    %v81 = vrot.slane %v72, %v80
    %v83 = vunpack.c.l.s4 1966171168
    %v84 = vunpack.c.0.s8 %v83
    %v85 = vlaneseq
    %v86 = vshrl.u32 %v85, 7
    %v87 = vsub.s32 %v84, %v86
    %v88 = vrot.slane %v74, %v87
    %v89 = vcombine.high %v81, %v81
    %v90 = vcombine.high %v88, %v88
    %v92 = vunpack.c.l.s4 1966171168
    %v93 = vunpack.c.0.s8 %v92
    %v94 = vlaneseq
    %v95 = vshrl.u32 %v94, 7
    %v96 = vsub.s32 %v93, %v95
    %v97 = vrot.slane %v81, %v96
    %v99 = vunpack.c.l.s4 1966171168
    %v100 = vunpack.c.0.s8 %v99
    %v101 = vlaneseq
    %v102 = vshrl.u32 %v101, 7
    %v103 = vsub.s32 %v100, %v102
    %v104 = vrot.slane %v88, %v103
    %v106 = vunpack.c.l.s4 1966171168
    %v107 = vunpack.c.0.s8 %v106
    %v108 = vlaneseq
    %v109 = vshrl.u32 %v108, 7
    %v110 = vsub.s32 %v107, %v109
    %v111 = vrot.slane %v89, %v110
    %v113 = vunpack.c.l.s4 1966171168
    %v114 = vunpack.c.0.s8 %v113
    %v115 = vlaneseq
    %v116 = vshrl.u32 %v115, 7
    %v117 = vsub.s32 %v114, %v116
    %v118 = vrot.slane %v90, %v117
    %v119 = vcombine.high %v97, %v97
    %v120 = vcombine.high %v104, %v104
    %v121 = vcombine.high %v111, %v111
    %v122 = vcombine.high %v118, %v118
    %v123 = vlaneseq
    %v124 = vshrl.u32 %v123, 7
    %v125 = vsub.s32 0, %v124
    %v126 = vrot.slane %v97, %v125
    %v127 = vlaneseq
    %v128 = vshrl.u32 %v127, 7
    %v129 = vsub.s32 0, %v128
    %v130 = vrot.slane %v111, %v129
    %v131 = vlaneseq
    %v132 = vshrl.u32 %v131, 7
    %v133 = vsub.s32 0, %v132
    %v134 = vrot.slane %v119, %v133
    %v135 = vlaneseq
    %v136 = vshrl.u32 %v135, 7
    %v137 = vsub.s32 0, %v136
    %v138 = vrot.slane %v121, %v137
    %v139 = vlaneseq
    %v140 = vshrl.u32 %v139, 7
    %v141 = vsub.s32 0, %v140
    %v142 = vrot.slane %v104, %v141
    %v143 = vlaneseq
    %v144 = vshrl.u32 %v143, 7
    %v145 = vsub.s32 0, %v144
    %v146 = vrot.slane %v118, %v145
    %v147 = vlaneseq
    %v148 = vshrl.u32 %v147, 7
    %v149 = vsub.s32 0, %v148
    %v150 = vrot.slane %v120, %v149
    %v151 = vlaneseq
    %v152 = vshrl.u32 %v151, 7
    %v153 = vsub.s32 0, %v152
    %v154 = vrot.slane %v122, %v153
    %v163 = vmul.f32 %v126, %v40
    %v164 = vmul.f32 %v126, %v41
    %v165 = vmul.f32 %v126, %v42
    %v166 = vmul.f32 %v126, %v43
    %v167 = vmul.f32 %v130, %v44
    %v168 = vmul.f32 %v130, %v45
    %v169 = vmul.f32 %v130, %v46
    %v170 = vmul.f32 %v130, %v47
    %v171 = vmul.f32 %v134, %v48
    %v172 = vmul.f32 %v134, %v49
    %v173 = vmul.f32 %v134, %v50
    %v174 = vmul.f32 %v134, %v51
    %v175 = vmul.f32 %v138, %v52
    %v176 = vmul.f32 %v138, %v53
    %v177 = vmul.f32 %v138, %v54
    %v178 = vmul.f32 %v138, %v55
    %v179 = vmul.f32 %v142, %v56
    %v180 = vmul.f32 %v142, %v57
    %v181 = vmul.f32 %v142, %v58
    %v182 = vmul.f32 %v142, %v59
    %v183 = vmul.f32 %v146, %v60
    %v184 = vmul.f32 %v146, %v61
    %v185 = vmul.f32 %v146, %v62
    %v186 = vmul.f32 %v146, %v63
    %v187 = vmul.f32 %v150, %v64
    %v188 = vmul.f32 %v150, %v65
    %v189 = vmul.f32 %v150, %v66
    %v190 = vmul.f32 %v150, %v67
    %v191 = vmul.f32 %v154, %v68
    %v192 = vmul.f32 %v154, %v69
    %v193 = vmul.f32 %v154, %v70
    %v194 = vmul.f32 %v154, %v71
    %v195 = vadd.f32 %v163, %v167
    %v196 = vadd.f32 %v195, %v171
    %v197 = vadd.f32 %v196, %v175
    %v198 = vadd.f32 %v197, %v179
    %v199 = vadd.f32 %v198, %v183
    %v200 = vadd.f32 %v199, %v187
    %v201 = vadd.f32 %v200, %v191
    %v202 = vadd.f32 %v164, %v168
    %v203 = vadd.f32 %v202, %v172
    %v204 = vadd.f32 %v203, %v176
    %v205 = vadd.f32 %v204, %v180
    %v206 = vadd.f32 %v205, %v184
    %v207 = vadd.f32 %v206, %v188
    %v208 = vadd.f32 %v207, %v192
    %v209 = vadd.f32 %v165, %v169
    %v210 = vadd.f32 %v209, %v173
    %v211 = vadd.f32 %v210, %v177
    %v212 = vadd.f32 %v211, %v181
    %v213 = vadd.f32 %v212, %v185
    %v214 = vadd.f32 %v213, %v189
    %v215 = vadd.f32 %v214, %v193
    %v216 = vadd.f32 %v166, %v170
    %v217 = vadd.f32 %v216, %v174
    %v218 = vadd.f32 %v217, %v178
    %v219 = vadd.f32 %v218, %v182
    %v220 = vadd.f32 %v219, %v186
    %v221 = vadd.f32 %v220, %v190
    %v222 = vadd.f32 %v221, %v194
    %v223 = vrot.slane %v72, 4
    %v224 = vadd.f32 %v72, %v223
    %v225 = vrot.slane %v224, 2
    %v226 = vadd.f32 %v224, %v225
    %v227 = vrot.slane %v226, 1
    %v228 = vadd.f32 %v226, %v227
    %v229 = vadd.f32 %v228, 1e-10
    %v230 = vrcp.pop %v229
    %v231 = vmul.f32 %v201, %v230
    %v232 = vmul.f32 %v208, %v230
    %v233 = vmul.f32 %v215, %v230
    %v234 = vmul.f32 %v222, %v230
    %v235 = vld [vmem:[%s1] sm:$0xff]
    %v236 = vld [vmem:[%s1 + $0x8] sm:$0x3]
    %v237 = vld [vmem:[%s1 + $0x10] sm:$0xff]
    %v238 = vld [vmem:[%s1 + $0x18] sm:$0x3]
    %v239 = vld [vmem:[%s1 + $0x20] sm:$0xff]
    %v240 = vld [vmem:[%s1 + $0x28] sm:$0x3]
    %v241 = vld [vmem:[%s1 + $0x30] sm:$0xff]
    %v242 = vld [vmem:[%s1 + $0x38] sm:$0x3]
    %v243 = vld [vmem:[%s1 + $0x40] sm:$0xff]
    %v244 = vld [vmem:[%s1 + $0x48] sm:$0x3]
    %v245 = vld [vmem:[%s1 + $0x50] sm:$0xff]
    %v246 = vld [vmem:[%s1 + $0x58] sm:$0x3]
    %v247 = vld [vmem:[%s1 + $0x60] sm:$0xff]
    %v248 = vld [vmem:[%s1 + $0x68] sm:$0x3]
    %v249 = vld [vmem:[%s1 + $0x70] sm:$0xff]
    %v250 = vld [vmem:[%s1 + $0x78] sm:$0x3]
    %v251 = vld [vmem:[%s1 + $0x80] sm:$0xff]
    %v252 = vld [vmem:[%s1 + $0x88] sm:$0x3]
    %v253 = vld [vmem:[%s1 + $0x90] sm:$0xff]
    %v254 = vld [vmem:[%s1 + $0x98] sm:$0x3]
    %v255 = vld [vmem:[%s1 + $0xa0] sm:$0xff]
    %v256 = vld [vmem:[%s1 + $0xa8] sm:$0x3]
    %v257 = vld [vmem:[%s1 + $0xb0] sm:$0xff]
    %v258 = vld [vmem:[%s1 + $0xb8] sm:$0x3]
    %v259 = vld [vmem:[%s1 + $0xc0] sm:$0xff]
    %v260 = vld [vmem:[%s1 + $0xc8] sm:$0x3]
    %v261 = vld [vmem:[%s1 + $0xd0] sm:$0xff]
    %v262 = vld [vmem:[%s1 + $0xd8] sm:$0x3]
    %v263 = vld [vmem:[%s1 + $0xe0] sm:$0xff]
    %v264 = vld [vmem:[%s1 + $0xe8] sm:$0x3]
    %v265 = vld [vmem:[%s1 + $0xf0] sm:$0xff]
    %v266 = vld [vmem:[%s1 + $0xf8] sm:$0x3]
    %v267 = vld [vmem:[%s1 + $0x100] sm:$0xff]
    %v268 = vld [vmem:[%s1 + $0x108] sm:$0x3]
    %v269 = vld [vmem:[%s1 + $0x110] sm:$0xff]
    %v270 = vld [vmem:[%s1 + $0x118] sm:$0x3]
    %v271 = vld [vmem:[%s1 + $0x120] sm:$0xff]
    %v272 = vld [vmem:[%s1 + $0x128] sm:$0x3]
    %v273 = vld [vmem:[%s1 + $0x130] sm:$0xff]
    %v274 = vld [vmem:[%s1 + $0x138] sm:$0x3]
    %v275 = vld [vmem:[%s1 + $0x140] sm:$0xff]
    %v276 = vld [vmem:[%s1 + $0x148] sm:$0x3]
    %v277 = vld [vmem:[%s1 + $0x150] sm:$0xff]
    %v278 = vld [vmem:[%s1 + $0x158] sm:$0x3]
    %v279 = vld [vmem:[%s1 + $0x160] sm:$0xff]
    %v280 = vld [vmem:[%s1 + $0x168] sm:$0x3]
    %v281 = vld [vmem:[%s1 + $0x170] sm:$0xff]
    %v282 = vld [vmem:[%s1 + $0x178] sm:$0x3]
    %v283 = vld [vmem:[%s1 + $0x180] sm:$0xff]
    %v284 = vld [vmem:[%s1 + $0x188] sm:$0x3]
    %v285 = vld [vmem:[%s1 + $0x190] sm:$0xff]
    %v286 = vld [vmem:[%s1 + $0x198] sm:$0x3]
    %v287 = vld [vmem:[%s1 + $0x1a0] sm:$0xff]
    %v288 = vld [vmem:[%s1 + $0x1a8] sm:$0x3]
    %v289 = vld [vmem:[%s1 + $0x1b0] sm:$0xff]
    %v290 = vld [vmem:[%s1 + $0x1b8] sm:$0x3]
    %v291 = vld [vmem:[%s1 + $0x1c0] sm:$0xff]
    %v292 = vld [vmem:[%s1 + $0x1c8] sm:$0x3]
    %v293 = vld [vmem:[%s1 + $0x1d0] sm:$0xff]
    %v294 = vld [vmem:[%s1 + $0x1d8] sm:$0x3]
    %v295 = vld [vmem:[%s1 + $0x1e0] sm:$0xff]
    %v296 = vld [vmem:[%s1 + $0x1e8] sm:$0x3]
    %v297 = vld [vmem:[%s1 + $0x1f0] sm:$0xff]
    %v298 = vld [vmem:[%s1 + $0x1f8] sm:$0x3]
    %v303 = vcombine.high %v231, %v231
    %v305 = vunpack.c.l.s4 1966171168
    %v306 = vunpack.c.0.s8 %v305
    %v307 = vlaneseq
    %v308 = vshrl.u32 %v307, 7
    %v309 = vsub.s32 %v306, %v308
    %v310 = vrot.slane %v231, %v309
    %v312 = vunpack.c.l.s4 1966171168
    %v313 = vunpack.c.0.s8 %v312
    %v314 = vlaneseq
    %v315 = vshrl.u32 %v314, 7
    %v316 = vsub.s32 %v313, %v315
    %v317 = vrot.slane %v303, %v316
    %v318 = vcombine.high %v310, %v310
    %v319 = vcombine.high %v317, %v317
    %v321 = vunpack.c.l.s4 1966171168
    %v322 = vunpack.c.0.s8 %v321
    %v323 = vlaneseq
    %v324 = vshrl.u32 %v323, 7
    %v325 = vsub.s32 %v322, %v324
    %v326 = vrot.slane %v310, %v325
    %v328 = vunpack.c.l.s4 1966171168
    %v329 = vunpack.c.0.s8 %v328
    %v330 = vlaneseq
    %v331 = vshrl.u32 %v330, 7
    %v332 = vsub.s32 %v329, %v331
    %v333 = vrot.slane %v317, %v332
    %v335 = vunpack.c.l.s4 1966171168
    %v336 = vunpack.c.0.s8 %v335
    %v337 = vlaneseq
    %v338 = vshrl.u32 %v337, 7
    %v339 = vsub.s32 %v336, %v338
    %v340 = vrot.slane %v318, %v339
    %v342 = vunpack.c.l.s4 1966171168
    %v343 = vunpack.c.0.s8 %v342
    %v344 = vlaneseq
    %v345 = vshrl.u32 %v344, 7
    %v346 = vsub.s32 %v343, %v345
    %v347 = vrot.slane %v319, %v346
    %v348 = vcombine.high %v326, %v326
    %v349 = vcombine.high %v333, %v333
    %v350 = vcombine.high %v340, %v340
    %v351 = vcombine.high %v347, %v347
    %v352 = vcombine.high %v232, %v232
    %v354 = vunpack.c.l.s4 1966171168
    %v355 = vunpack.c.0.s8 %v354
    %v356 = vlaneseq
    %v357 = vshrl.u32 %v356, 7
    %v358 = vsub.s32 %v355, %v357
    %v359 = vrot.slane %v232, %v358
    %v361 = vunpack.c.l.s4 1966171168
    %v362 = vunpack.c.0.s8 %v361
    %v363 = vlaneseq
    %v364 = vshrl.u32 %v363, 7
    %v365 = vsub.s32 %v362, %v364
    %v366 = vrot.slane %v352, %v365
    %v367 = vcombine.high %v359, %v359
    %v368 = vcombine.high %v366, %v366
    %v370 = vunpack.c.l.s4 1966171168
    %v371 = vunpack.c.0.s8 %v370
    %v372 = vlaneseq
    %v373 = vshrl.u32 %v372, 7
    %v374 = vsub.s32 %v371, %v373
    %v375 = vrot.slane %v359, %v374
    %v377 = vunpack.c.l.s4 1966171168
    %v378 = vunpack.c.0.s8 %v377
    %v379 = vlaneseq
    %v380 = vshrl.u32 %v379, 7
    %v381 = vsub.s32 %v378, %v380
    %v382 = vrot.slane %v366, %v381
    %v384 = vunpack.c.l.s4 1966171168
    %v385 = vunpack.c.0.s8 %v384
    %v386 = vlaneseq
    %v387 = vshrl.u32 %v386, 7
    %v388 = vsub.s32 %v385, %v387
    %v389 = vrot.slane %v367, %v388
    %v391 = vunpack.c.l.s4 1966171168
    %v392 = vunpack.c.0.s8 %v391
    %v393 = vlaneseq
    %v394 = vshrl.u32 %v393, 7
    %v395 = vsub.s32 %v392, %v394
    %v396 = vrot.slane %v368, %v395
    %v397 = vcombine.high %v375, %v375
    %v398 = vcombine.high %v382, %v382
    %v399 = vcombine.high %v389, %v389
    %v400 = vcombine.high %v396, %v396
    %v401 = vcombine.high %v233, %v233
    %v403 = vunpack.c.l.s4 1966171168
    %v404 = vunpack.c.0.s8 %v403
    %v405 = vlaneseq
    %v406 = vshrl.u32 %v405, 7
    %v407 = vsub.s32 %v404, %v406
    %v408 = vrot.slane %v233, %v407
    %v410 = vunpack.c.l.s4 1966171168
    %v411 = vunpack.c.0.s8 %v410
    %v412 = vlaneseq
    %v413 = vshrl.u32 %v412, 7
    %v414 = vsub.s32 %v411, %v413
    %v415 = vrot.slane %v401, %v414
    %v416 = vcombine.high %v408, %v408
    %v417 = vcombine.high %v415, %v415
    %v419 = vunpack.c.l.s4 1966171168
    %v420 = vunpack.c.0.s8 %v419
    %v421 = vlaneseq
    %v422 = vshrl.u32 %v421, 7
    %v423 = vsub.s32 %v420, %v422
    %v424 = vrot.slane %v408, %v423
    %v426 = vunpack.c.l.s4 1966171168
    %v427 = vunpack.c.0.s8 %v426
    %v428 = vlaneseq
    %v429 = vshrl.u32 %v428, 7
    %v430 = vsub.s32 %v427, %v429
    %v431 = vrot.slane %v415, %v430
    %v433 = vunpack.c.l.s4 1966171168
    %v434 = vunpack.c.0.s8 %v433
    %v435 = vlaneseq
    %v436 = vshrl.u32 %v435, 7
    %v437 = vsub.s32 %v434, %v436
    %v438 = vrot.slane %v416, %v437
    %v440 = vunpack.c.l.s4 1966171168
    %v441 = vunpack.c.0.s8 %v440
    %v442 = vlaneseq
    %v443 = vshrl.u32 %v442, 7
    %v444 = vsub.s32 %v441, %v443
    %v445 = vrot.slane %v417, %v444
    %v446 = vcombine.high %v424, %v424
    %v447 = vcombine.high %v431, %v431
    %v448 = vcombine.high %v438, %v438
    %v449 = vcombine.high %v445, %v445
    %v450 = vcombine.high %v234, %v234
    %v452 = vunpack.c.l.s4 1966171168
    %v453 = vunpack.c.0.s8 %v452
    %v454 = vlaneseq
    %v455 = vshrl.u32 %v454, 7
    %v456 = vsub.s32 %v453, %v455
    %v457 = vrot.slane %v234, %v456
    %v459 = vunpack.c.l.s4 1966171168
    %v460 = vunpack.c.0.s8 %v459
    %v461 = vlaneseq
    %v462 = vshrl.u32 %v461, 7
    %v463 = vsub.s32 %v460, %v462
    %v464 = vrot.slane %v450, %v463
    %v465 = vcombine.high %v457, %v457
    %v466 = vcombine.high %v464, %v464
    %v468 = vunpack.c.l.s4 1966171168
    %v469 = vunpack.c.0.s8 %v468
    %v470 = vlaneseq
    %v471 = vshrl.u32 %v470, 7
    %v472 = vsub.s32 %v469, %v471
    %v473 = vrot.slane %v457, %v472
    %v475 = vunpack.c.l.s4 1966171168
    %v476 = vunpack.c.0.s8 %v475
    %v477 = vlaneseq
    %v478 = vshrl.u32 %v477, 7
    %v479 = vsub.s32 %v476, %v478
    %v480 = vrot.slane %v464, %v479
    %v482 = vunpack.c.l.s4 1966171168
    %v483 = vunpack.c.0.s8 %v482
    %v484 = vlaneseq
    %v485 = vshrl.u32 %v484, 7
    %v486 = vsub.s32 %v483, %v485
    %v487 = vrot.slane %v465, %v486
    %v489 = vunpack.c.l.s4 1966171168
    %v490 = vunpack.c.0.s8 %v489
    %v491 = vlaneseq
    %v492 = vshrl.u32 %v491, 7
    %v493 = vsub.s32 %v490, %v492
    %v494 = vrot.slane %v466, %v493
    %v495 = vcombine.high %v473, %v473
    %v496 = vcombine.high %v480, %v480
    %v497 = vcombine.high %v487, %v487
    %v498 = vcombine.high %v494, %v494
    %v499 = vlaneseq
    %v500 = vshrl.u32 %v499, 7
    %v501 = vsub.s32 0, %v500
    %v502 = vrot.slane %v326, %v501
    %v503 = vlaneseq
    %v504 = vshrl.u32 %v503, 7
    %v505 = vsub.s32 0, %v504
    %v506 = vrot.slane %v340, %v505
    %v507 = vlaneseq
    %v508 = vshrl.u32 %v507, 7
    %v509 = vsub.s32 0, %v508
    %v510 = vrot.slane %v348, %v509
    %v511 = vlaneseq
    %v512 = vshrl.u32 %v511, 7
    %v513 = vsub.s32 0, %v512
    %v514 = vrot.slane %v350, %v513
    %v515 = vlaneseq
    %v516 = vshrl.u32 %v515, 7
    %v517 = vsub.s32 0, %v516
    %v518 = vrot.slane %v333, %v517
    %v519 = vlaneseq
    %v520 = vshrl.u32 %v519, 7
    %v521 = vsub.s32 0, %v520
    %v522 = vrot.slane %v347, %v521
    %v523 = vlaneseq
    %v524 = vshrl.u32 %v523, 7
    %v525 = vsub.s32 0, %v524
    %v526 = vrot.slane %v349, %v525
    %v527 = vlaneseq
    %v528 = vshrl.u32 %v527, 7
    %v529 = vsub.s32 0, %v528
    %v530 = vrot.slane %v351, %v529
    %v531 = vlaneseq
    %v532 = vshrl.u32 %v531, 7
    %v533 = vsub.s32 0, %v532
    %v534 = vrot.slane %v375, %v533
    %v535 = vlaneseq
    %v536 = vshrl.u32 %v535, 7
    %v537 = vsub.s32 0, %v536
    %v538 = vrot.slane %v389, %v537
    %v539 = vlaneseq
    %v540 = vshrl.u32 %v539, 7
    %v541 = vsub.s32 0, %v540
    %v542 = vrot.slane %v397, %v541
    %v543 = vlaneseq
    %v544 = vshrl.u32 %v543, 7
    %v545 = vsub.s32 0, %v544
    %v546 = vrot.slane %v399, %v545
    %v547 = vlaneseq
    %v548 = vshrl.u32 %v547, 7
    %v549 = vsub.s32 0, %v548
    %v550 = vrot.slane %v382, %v549
    %v551 = vlaneseq
    %v552 = vshrl.u32 %v551, 7
    %v553 = vsub.s32 0, %v552
    %v554 = vrot.slane %v396, %v553
    %v555 = vlaneseq
    %v556 = vshrl.u32 %v555, 7
    %v557 = vsub.s32 0, %v556
    %v558 = vrot.slane %v398, %v557
    %v559 = vlaneseq
    %v560 = vshrl.u32 %v559, 7
    %v561 = vsub.s32 0, %v560
    %v562 = vrot.slane %v400, %v561
    %v563 = vlaneseq
    %v564 = vshrl.u32 %v563, 7
    %v565 = vsub.s32 0, %v564
    %v566 = vrot.slane %v424, %v565
    %v567 = vlaneseq
    %v568 = vshrl.u32 %v567, 7
    %v569 = vsub.s32 0, %v568
    %v570 = vrot.slane %v438, %v569
    %v571 = vlaneseq
    %v572 = vshrl.u32 %v571, 7
    %v573 = vsub.s32 0, %v572
    %v574 = vrot.slane %v446, %v573
    %v575 = vlaneseq
    %v576 = vshrl.u32 %v575, 7
    %v577 = vsub.s32 0, %v576
    %v578 = vrot.slane %v448, %v577
    %v579 = vlaneseq
    %v580 = vshrl.u32 %v579, 7
    %v581 = vsub.s32 0, %v580
    %v582 = vrot.slane %v431, %v581
    %v583 = vlaneseq
    %v584 = vshrl.u32 %v583, 7
    %v585 = vsub.s32 0, %v584
    %v586 = vrot.slane %v445, %v585
    %v587 = vlaneseq
    %v588 = vshrl.u32 %v587, 7
    %v589 = vsub.s32 0, %v588
    %v590 = vrot.slane %v447, %v589
    %v591 = vlaneseq
    %v592 = vshrl.u32 %v591, 7
    %v593 = vsub.s32 0, %v592
    %v594 = vrot.slane %v449, %v593
    %v595 = vlaneseq
    %v596 = vshrl.u32 %v595, 7
    %v597 = vsub.s32 0, %v596
    %v598 = vrot.slane %v473, %v597
    %v599 = vlaneseq
    %v600 = vshrl.u32 %v599, 7
    %v601 = vsub.s32 0, %v600
    %v602 = vrot.slane %v487, %v601
    %v603 = vlaneseq
    %v604 = vshrl.u32 %v603, 7
    %v605 = vsub.s32 0, %v604
    %v606 = vrot.slane %v495, %v605
    %v607 = vlaneseq
    %v608 = vshrl.u32 %v607, 7
    %v609 = vsub.s32 0, %v608
    %v610 = vrot.slane %v497, %v609
    %v611 = vlaneseq
    %v612 = vshrl.u32 %v611, 7
    %v613 = vsub.s32 0, %v612
    %v614 = vrot.slane %v480, %v613
    %v615 = vlaneseq
    %v616 = vshrl.u32 %v615, 7
    %v617 = vsub.s32 0, %v616
    %v618 = vrot.slane %v494, %v617
    %v619 = vlaneseq
    %v620 = vshrl.u32 %v619, 7
    %v621 = vsub.s32 0, %v620
    %v622 = vrot.slane %v496, %v621
    %v623 = vlaneseq
    %v624 = vshrl.u32 %v623, 7
    %v625 = vsub.s32 0, %v624
    %v626 = vrot.slane %v498, %v625
    %v659 = vmul.f32 %v502, %v235
    %v660 = vmul.f32 %v502, %v236
    %v661 = vmul.f32 %v506, %v237
    %v662 = vmul.f32 %v506, %v238
    %v663 = vmul.f32 %v510, %v239
    %v664 = vmul.f32 %v510, %v240
    %v665 = vmul.f32 %v514, %v241
    %v666 = vmul.f32 %v514, %v242
    %v667 = vmul.f32 %v518, %v243
    %v668 = vmul.f32 %v518, %v244
    %v669 = vmul.f32 %v522, %v245
    %v670 = vmul.f32 %v522, %v246
    %v671 = vmul.f32 %v526, %v247
    %v672 = vmul.f32 %v526, %v248
    %v673 = vmul.f32 %v530, %v249
    %v674 = vmul.f32 %v530, %v250
    %v675 = vmul.f32 %v534, %v251
    %v676 = vmul.f32 %v534, %v252
    %v677 = vmul.f32 %v538, %v253
    %v678 = vmul.f32 %v538, %v254
    %v679 = vmul.f32 %v542, %v255
    %v680 = vmul.f32 %v542, %v256
    %v681 = vmul.f32 %v546, %v257
    %v682 = vmul.f32 %v546, %v258
    %v683 = vmul.f32 %v550, %v259
    %v684 = vmul.f32 %v550, %v260
    %v685 = vmul.f32 %v554, %v261
    %v686 = vmul.f32 %v554, %v262
    %v687 = vmul.f32 %v558, %v263
    %v688 = vmul.f32 %v558, %v264
    %v689 = vmul.f32 %v562, %v265
    %v690 = vmul.f32 %v562, %v266
    %v691 = vmul.f32 %v566, %v267
    %v692 = vmul.f32 %v566, %v268
    %v693 = vmul.f32 %v570, %v269
    %v694 = vmul.f32 %v570, %v270
    %v695 = vmul.f32 %v574, %v271
    %v696 = vmul.f32 %v574, %v272
    %v697 = vmul.f32 %v578, %v273
    %v698 = vmul.f32 %v578, %v274
    %v699 = vmul.f32 %v582, %v275
    %v700 = vmul.f32 %v582, %v276
    %v701 = vmul.f32 %v586, %v277
    %v702 = vmul.f32 %v586, %v278
    %v703 = vmul.f32 %v590, %v279
    %v704 = vmul.f32 %v590, %v280
    %v705 = vmul.f32 %v594, %v281
    %v706 = vmul.f32 %v594, %v282
    %v707 = vmul.f32 %v598, %v283
    %v708 = vmul.f32 %v598, %v284
    %v709 = vmul.f32 %v602, %v285
    %v710 = vmul.f32 %v602, %v286
    %v711 = vmul.f32 %v606, %v287
    %v712 = vmul.f32 %v606, %v288
    %v713 = vmul.f32 %v610, %v289
    %v714 = vmul.f32 %v610, %v290
    %v715 = vmul.f32 %v614, %v291
    %v716 = vmul.f32 %v614, %v292
    %v717 = vmul.f32 %v618, %v293
    %v718 = vmul.f32 %v618, %v294
    %v719 = vmul.f32 %v622, %v295
    %v720 = vmul.f32 %v622, %v296
    %v721 = vmul.f32 %v626, %v297
    %v722 = vmul.f32 %v626, %v298
    %v723 = vadd.f32 %v659, %v661
    %v724 = vadd.f32 %v723, %v663
    %v725 = vadd.f32 %v724, %v665
    %v726 = vadd.f32 %v725, %v667
    %v727 = vadd.f32 %v726, %v669
    %v728 = vadd.f32 %v727, %v671
    %v729 = vadd.f32 %v728, %v673
    %v730 = vadd.f32 %v729, %v675
    %v731 = vadd.f32 %v730, %v677
    %v732 = vadd.f32 %v731, %v679
    %v733 = vadd.f32 %v732, %v681
    %v734 = vadd.f32 %v733, %v683
    %v735 = vadd.f32 %v734, %v685
    %v736 = vadd.f32 %v735, %v687
    %v737 = vadd.f32 %v736, %v689
    %v738 = vadd.f32 %v737, %v691
    %v739 = vadd.f32 %v738, %v693
    %v740 = vadd.f32 %v739, %v695
    %v741 = vadd.f32 %v740, %v697
    %v742 = vadd.f32 %v741, %v699
    %v743 = vadd.f32 %v742, %v701
    %v744 = vadd.f32 %v743, %v703
    %v745 = vadd.f32 %v744, %v705
    %v746 = vadd.f32 %v745, %v707
    %v747 = vadd.f32 %v746, %v709
    %v748 = vadd.f32 %v747, %v711
    %v749 = vadd.f32 %v748, %v713
    %v750 = vadd.f32 %v749, %v715
    %v751 = vadd.f32 %v750, %v717
    %v752 = vadd.f32 %v751, %v719
    %v753 = vadd.f32 %v752, %v721
    %vm754 = vcmask 1041408
    %v755 = vsel %vm754, %v660, 0.0
    %v756 = vsel %vm754, %v662, 0.0
    %v757 = vadd.f32 %v755, %v756
    %v758 = vsel %vm754, %v664, 0.0
    %v759 = vadd.f32 %v757, %v758
    %v760 = vsel %vm754, %v666, 0.0
    %v761 = vadd.f32 %v759, %v760
    %v762 = vsel %vm754, %v668, 0.0
    %v763 = vadd.f32 %v761, %v762
    %v764 = vsel %vm754, %v670, 0.0
    %v765 = vadd.f32 %v763, %v764
    %v766 = vsel %vm754, %v672, 0.0
    %v767 = vadd.f32 %v765, %v766
    %v768 = vsel %vm754, %v674, 0.0
    %v769 = vadd.f32 %v767, %v768
    %v770 = vsel %vm754, %v676, 0.0
    %v771 = vadd.f32 %v769, %v770
    %v772 = vsel %vm754, %v678, 0.0
    %v773 = vadd.f32 %v771, %v772
    %v774 = vsel %vm754, %v680, 0.0
    %v775 = vadd.f32 %v773, %v774
    %v776 = vsel %vm754, %v682, 0.0
    %v777 = vadd.f32 %v775, %v776
    %v778 = vsel %vm754, %v684, 0.0
    %v779 = vadd.f32 %v777, %v778
    %v780 = vsel %vm754, %v686, 0.0
    %v781 = vadd.f32 %v779, %v780
    %v782 = vsel %vm754, %v688, 0.0
    %v783 = vadd.f32 %v781, %v782
    %v784 = vsel %vm754, %v690, 0.0
    %v785 = vadd.f32 %v783, %v784
    %v786 = vsel %vm754, %v692, 0.0
    %v787 = vadd.f32 %v785, %v786
    %v788 = vsel %vm754, %v694, 0.0
    %v789 = vadd.f32 %v787, %v788
    %v790 = vsel %vm754, %v696, 0.0
    %v791 = vadd.f32 %v789, %v790
    %v792 = vsel %vm754, %v698, 0.0
    %v793 = vadd.f32 %v791, %v792
    %v794 = vsel %vm754, %v700, 0.0
    %v795 = vadd.f32 %v793, %v794
    %v796 = vsel %vm754, %v702, 0.0
    %v797 = vadd.f32 %v795, %v796
    %v798 = vsel %vm754, %v704, 0.0
    %v799 = vadd.f32 %v797, %v798
    %v800 = vsel %vm754, %v706, 0.0
    %v801 = vadd.f32 %v799, %v800
    %v802 = vsel %vm754, %v708, 0.0
    %v803 = vadd.f32 %v801, %v802
    %v804 = vsel %vm754, %v710, 0.0
    %v805 = vadd.f32 %v803, %v804
    %v806 = vsel %vm754, %v712, 0.0
    %v807 = vadd.f32 %v805, %v806
    %v808 = vsel %vm754, %v714, 0.0
    %v809 = vadd.f32 %v807, %v808
    %v810 = vsel %vm754, %v716, 0.0
    %v811 = vadd.f32 %v809, %v810
    %v812 = vsel %vm754, %v718, 0.0
    %v813 = vadd.f32 %v811, %v812
    %v814 = vsel %vm754, %v720, 0.0
    %v815 = vadd.f32 %v813, %v814
    %v816 = vsel %vm754, %v722, 0.0
    %v817 = vadd.f32 %v815, %v816
    %v818 = vmul.f32 %v235, %v235
    %v819 = vmul.f32 %v236, %v236
    %v820 = vmul.f32 %v237, %v237
    %v821 = vmul.f32 %v238, %v238
    %v822 = vmul.f32 %v239, %v239
    %v823 = vmul.f32 %v240, %v240
    %v824 = vmul.f32 %v241, %v241
    %v825 = vmul.f32 %v242, %v242
    %v826 = vmul.f32 %v243, %v243
    %v827 = vmul.f32 %v244, %v244
    %v828 = vmul.f32 %v245, %v245
    %v829 = vmul.f32 %v246, %v246
    %v830 = vmul.f32 %v247, %v247
    %v831 = vmul.f32 %v248, %v248
    %v832 = vmul.f32 %v249, %v249
    %v833 = vmul.f32 %v250, %v250
    %v834 = vmul.f32 %v251, %v251
    %v835 = vmul.f32 %v252, %v252
    %v836 = vmul.f32 %v253, %v253
    %v837 = vmul.f32 %v254, %v254
    %v838 = vmul.f32 %v255, %v255
    %v839 = vmul.f32 %v256, %v256
    %v840 = vmul.f32 %v257, %v257
    %v841 = vmul.f32 %v258, %v258
    %v842 = vmul.f32 %v259, %v259
    %v843 = vmul.f32 %v260, %v260
    %v844 = vmul.f32 %v261, %v261
    %v845 = vmul.f32 %v262, %v262
    %v846 = vmul.f32 %v263, %v263
    %v847 = vmul.f32 %v264, %v264
    %v848 = vmul.f32 %v265, %v265
    %v849 = vmul.f32 %v266, %v266
    %v850 = vmul.f32 %v267, %v267
    %v851 = vmul.f32 %v268, %v268
    %v852 = vmul.f32 %v269, %v269
    %v853 = vmul.f32 %v270, %v270
    %v854 = vmul.f32 %v271, %v271
    %v855 = vmul.f32 %v272, %v272
    %v856 = vmul.f32 %v273, %v273
    %v857 = vmul.f32 %v274, %v274
    %v858 = vmul.f32 %v275, %v275
    %v859 = vmul.f32 %v276, %v276
    %v860 = vmul.f32 %v277, %v277
    %v861 = vmul.f32 %v278, %v278
    %v862 = vmul.f32 %v279, %v279
    %v863 = vmul.f32 %v280, %v280
    %v864 = vmul.f32 %v281, %v281
    %v865 = vmul.f32 %v282, %v282
    %v866 = vmul.f32 %v283, %v283
    %v867 = vmul.f32 %v284, %v284
    %v868 = vmul.f32 %v285, %v285
    %v869 = vmul.f32 %v286, %v286
    %v870 = vmul.f32 %v287, %v287
    %v871 = vmul.f32 %v288, %v288
    %v872 = vmul.f32 %v289, %v289
    %v873 = vmul.f32 %v290, %v290
    %v874 = vmul.f32 %v291, %v291
    %v875 = vmul.f32 %v292, %v292
    %v876 = vmul.f32 %v293, %v293
    %v877 = vmul.f32 %v294, %v294
    %v878 = vmul.f32 %v295, %v295
    %v879 = vmul.f32 %v296, %v296
    %v880 = vmul.f32 %v297, %v297
    %v881 = vmul.f32 %v298, %v298
    %v882 = vadd.f32 %v818, %v820
    %v883 = vadd.f32 %v882, %v822
    %v884 = vadd.f32 %v883, %v824
    %v885 = vadd.f32 %v884, %v826
    %v886 = vadd.f32 %v885, %v828
    %v887 = vadd.f32 %v886, %v830
    %v888 = vadd.f32 %v887, %v832
    %v889 = vadd.f32 %v888, %v834
    %v890 = vadd.f32 %v889, %v836
    %v891 = vadd.f32 %v890, %v838
    %v892 = vadd.f32 %v891, %v840
    %v893 = vadd.f32 %v892, %v842
    %v894 = vadd.f32 %v893, %v844
    %v895 = vadd.f32 %v894, %v846
    %v896 = vadd.f32 %v895, %v848
    %v897 = vadd.f32 %v896, %v850
    %v898 = vadd.f32 %v897, %v852
    %v899 = vadd.f32 %v898, %v854
    %v900 = vadd.f32 %v899, %v856
    %v901 = vadd.f32 %v900, %v858
    %v902 = vadd.f32 %v901, %v860
    %v903 = vadd.f32 %v902, %v862
    %v904 = vadd.f32 %v903, %v864
    %v905 = vadd.f32 %v904, %v866
    %v906 = vadd.f32 %v905, %v868
    %v907 = vadd.f32 %v906, %v870
    %v908 = vadd.f32 %v907, %v872
    %v909 = vadd.f32 %v908, %v874
    %v910 = vadd.f32 %v909, %v876
    %v911 = vadd.f32 %v910, %v878
    %v912 = vadd.f32 %v911, %v880
    %v913 = vsel %vm754, %v819, 0.0
    %v914 = vsel %vm754, %v821, 0.0
    %v915 = vadd.f32 %v913, %v914
    %v916 = vsel %vm754, %v823, 0.0
    %v917 = vadd.f32 %v915, %v916
    %v918 = vsel %vm754, %v825, 0.0
    %v919 = vadd.f32 %v917, %v918
    %v920 = vsel %vm754, %v827, 0.0
    %v921 = vadd.f32 %v919, %v920
    %v922 = vsel %vm754, %v829, 0.0
    %v923 = vadd.f32 %v921, %v922
    %v924 = vsel %vm754, %v831, 0.0
    %v925 = vadd.f32 %v923, %v924
    %v926 = vsel %vm754, %v833, 0.0
    %v927 = vadd.f32 %v925, %v926
    %v928 = vsel %vm754, %v835, 0.0
    %v929 = vadd.f32 %v927, %v928
    %v930 = vsel %vm754, %v837, 0.0
    %v931 = vadd.f32 %v929, %v930
    %v932 = vsel %vm754, %v839, 0.0
    %v933 = vadd.f32 %v931, %v932
    %v934 = vsel %vm754, %v841, 0.0
    %v935 = vadd.f32 %v933, %v934
    %v936 = vsel %vm754, %v843, 0.0
    %v937 = vadd.f32 %v935, %v936
    %v938 = vsel %vm754, %v845, 0.0
    %v939 = vadd.f32 %v937, %v938
    %v940 = vsel %vm754, %v847, 0.0
    %v941 = vadd.f32 %v939, %v940
    %v942 = vsel %vm754, %v849, 0.0
    %v943 = vadd.f32 %v941, %v942
    %v944 = vsel %vm754, %v851, 0.0
    %v945 = vadd.f32 %v943, %v944
    %v946 = vsel %vm754, %v853, 0.0
    %v947 = vadd.f32 %v945, %v946
    %v948 = vsel %vm754, %v855, 0.0
    %v949 = vadd.f32 %v947, %v948
    %v950 = vsel %vm754, %v857, 0.0
    %v951 = vadd.f32 %v949, %v950
    %v952 = vsel %vm754, %v859, 0.0
    %v953 = vadd.f32 %v951, %v952
    %v954 = vsel %vm754, %v861, 0.0
    %v955 = vadd.f32 %v953, %v954
    %v956 = vsel %vm754, %v863, 0.0
    %v957 = vadd.f32 %v955, %v956
    %v958 = vsel %vm754, %v865, 0.0
    %v959 = vadd.f32 %v957, %v958
    %v960 = vsel %vm754, %v867, 0.0
    %v961 = vadd.f32 %v959, %v960
    %v962 = vsel %vm754, %v869, 0.0
    %v963 = vadd.f32 %v961, %v962
    %v964 = vsel %vm754, %v871, 0.0
    %v965 = vadd.f32 %v963, %v964
    %v966 = vsel %vm754, %v873, 0.0
    %v967 = vadd.f32 %v965, %v966
    %v968 = vsel %vm754, %v875, 0.0
    %v969 = vadd.f32 %v967, %v968
    %v970 = vsel %vm754, %v877, 0.0
    %v971 = vadd.f32 %v969, %v970
    %v972 = vsel %vm754, %v879, 0.0
    %v973 = vadd.f32 %v971, %v972
    %v974 = vsel %vm754, %v881, 0.0
    %v975 = vadd.f32 %v973, %v974
    %v976 = vmul.f32 %v231, %v231
    %v977 = vmul.f32 %v232, %v232
    %v978 = vmul.f32 %v233, %v233
    %v979 = vmul.f32 %v234, %v234
    %v980 = vadd.f32 %v976, %v977
    %v981 = vadd.f32 %v980, %v978
    %v982 = vadd.f32 %v981, %v979
    %v983 = vrot.slane %v982, 4
    %v984 = vadd.f32 %v982, %v983
    %v985 = vrot.slane %v984, 2
    %v986 = vadd.f32 %v984, %v985
    %v987 = vrot.slane %v986, 1
    %v988 = vadd.f32 %v986, %v987
    %v989 = vrsqrt.pop %v988
    %v990 = vmul.f32 %v988, %v989
    %vm991 = vcmp.eq.f32.partialorder %v988, inf
    %v992 = vsel %vm991, %v988, %v990
    %vm993 = vcmp.eq.f32.partialorder %v988, 0.0
    %v994 = vand.u32 %v988, 2147483648
    %v995 = vsel %vm993, %v994, %v992
    %v996 = vmax.f32 %v995, 1e-08
    %v997 = vrsqrt.pop %v912
    %v998 = vmul.f32 %v912, %v997
    %vm999 = vcmp.eq.f32.partialorder %v912, inf
    %v1000 = vsel %vm999, %v912, %v998
    %vm1001 = vcmp.eq.f32.partialorder %v912, 0.0
    %v1002 = vand.u32 %v912, 2147483648
    %v1003 = vsel %vm1001, %v1002, %v1000
    %v1004 = vrsqrt.pop %v975
    %v1005 = vmul.f32 %v975, %v1004
    %vm1006 = vcmp.eq.f32.partialorder %v975, inf
    %v1007 = vsel %vm1006, %v975, %v1005
    %vm1008 = vcmp.eq.f32.partialorder %v975, 0.0
    %v1009 = vand.u32 %v975, 2147483648
    %v1010 = vsel %vm1008, %v1009, %v1007
    %v1011 = vmax.f32 %v1003, 1e-08
    %v1012 = vmax.f32 %v1010, 1e-08
    %v1013 = vmul.f32 %v996, %v1011
    %v1014 = vmul.f32 %v996, %v1012
    %v1015 = vrcp.pop %v1013
    %v1016 = vmul.f32 %v753, %v1015
    %v1017 = vrcp.pop %v1014
    %v1018 = vmul.f32 %v817, %v1017
    %v1019 = vxor.u32 %v1016, 2147483648
    %v1020 = vxor.u32 %v1018, 2147483648
    %v1021 = vmul.f32 %v1019, 1.442695
    %v1022 = vpow.pop %v1021
    %v1023 = vmul.f32 %v1020, 1.442695
    %v1024 = vpow.pop %v1023
    %v1025 = vadd.f32 %v1022, 1.0
    %v1026 = vadd.f32 %v1024, 1.0
    %v1027 = vrcp.pop %v1025
    %v1028 = vmul.f32 1.0, %v1027
    %v1029 = vrcp.pop %v1026
    %v1030 = vmul.f32 1.0, %v1029
    %v1031 = vld [vmem:[%s3] sm:$0xff]
    %v1032 = vld [vmem:[%s3 + $0x8] sm:$0x3]
    %v1033 = vld [vmem:[%s4] sm:$0xff]
    %v1034 = vld [vmem:[%s4 + $0x8] sm:$0x3]
    %v1035 = vld [vmem:[%s2 + $0x28] sm:$0xff]
    %v1036 = vld [vmem:[%s2 + $0x30] sm:$0x3]
    %1038 = vset.pattern.permute.xlu0 0
    %1039 = vperm.xlu0 %1038, %v1033
    %v1040 = vpop.permute.xlu0 %1039
    %1043 = vset.pattern.permute.xlu0 0
    %1044 = vperm.xlu0 %1043, %v1034
    %v1045 = vpop.permute.xlu0 %1044
    %vm1047 = vcmask 80896
    %v1049 = vsel %vm1047, %v1031, 0
    %v1052 = vsel %vm1047, %v1032, 0
    %v1055 = vsel %vm754, %v1030, 0
    %1057 = vmatprep.subr.mxu0 0.0
    %1058 = vmatpush1.msra.mxu0 %v1028
    %1059 = vmatprep.subr.mxu0 0.0
    %1060 = vmatpush1.msra.mxu0 %v1055
    %1061 = vmatprep.subr.mxu0 0.0
    %1062 = vmatpush1.msra.mxu0 0.0
    %1063 = vmatprep.subr.mxu0 0.0
    %1064 = vmatpush1.msra.mxu0 0.0
    %1065 = vmatprep.subr.mxu0 0.0
    %1066 = vmatpush1.msra.mxu0 0.0
    %1067 = vmatprep.subr.mxu0 0.0
    %1068 = vmatpush1.msra.mxu0 0.0
    %1069 = vmatprep.subr.mxu0 0.0
    %1070 = vmatpush1.msra.mxu0 0.0
    %1071 = vmatprep.subr.mxu0 0.0
    %1072 = vmatpush1.msra.mxu0 0.0
    %1073 = vmatprep.subr.mxu0 0.0
    %1074 = vmatpush1.msra.mxu0 0.0
    %1075 = vmatprep.subr.mxu0 0.0
    %1076 = vmatpush1.msra.mxu0 0.0
    %1077 = vmatprep.subr.mxu0 0.0
    %1078 = vmatpush1.msra.mxu0 0.0
    %1079 = vmatprep.subr.mxu0 0.0
    %1080 = vmatpush1.msra.mxu0 0.0
    %1081 = vmatprep.subr.mxu0 0.0
    %1082 = vmatpush1.msra.mxu0 0.0
    %1083 = vmatprep.subr.mxu0 0.0
    %1084 = vmatpush1.msra.mxu0 0.0
    %1085 = vmatprep.subr.mxu0 0.0
    %1086 = vmatpush1.msra.mxu0 0.0
    %1087 = vmatprep.subr.mxu0 0.0
    %1088 = vmatpush1.msra.mxu0 0.0
    %1089 = vmatprep.subr.mxu0 0.0
    %1090 = vmatpush1.msra.mxu0 0.0
    %1091 = vmatprep.subr.mxu0 0.0
    %1092 = vmatpush1.msra.mxu0 0.0
    %1093 = vmatprep.subr.mxu0 0.0
    %1094 = vmatpush1.msra.mxu0 0.0
    %1095 = vmatprep.subr.mxu0 0.0
    %1096 = vmatpush1.msra.mxu0 0.0
    %1097 = vmatprep.subr.mxu0 0.0
    %1098 = vmatpush1.msra.mxu0 0.0
    %1099 = vmatprep.subr.mxu0 0.0
    %1100 = vmatpush1.msra.mxu0 0.0
    %1101 = vmatprep.subr.mxu0 0.0
    %1102 = vmatpush1.msra.mxu0 0.0
    %1103 = vmatprep.subr.mxu0 0.0
    %1104 = vmatpush1.msra.mxu0 0.0
    %1105 = vmatprep.subr.mxu0 0.0
    %1106 = vmatpush1.msra.mxu0 0.0
    %1107 = vmatprep.subr.mxu0 0.0
    %1108 = vmatpush1.msra.mxu0 0.0
    %1109 = vmatprep.subr.mxu0 0.0
    %1110 = vmatpush1.msra.mxu0 0.0
    %1111 = vmatprep.subr.mxu0 0.0
    %1112 = vmatpush1.msra.mxu0 0.0
    %1113 = vmatprep.subr.mxu0 0.0
    %1114 = vmatpush1.msra.mxu0 0.0
    %1115 = vmatprep.subr.mxu0 0.0
    %1116 = vmatpush1.msra.mxu0 0.0
    %1117 = vmatprep.subr.mxu0 0.0
    %1118 = vmatpush1.msra.mxu0 0.0
    %1119 = vmatprep.subr.mxu0 0.0
    %1120 = vmatpush1.msra.mxu0 0.0
    %1121 = vmatprep.mubr.f32.mxu0 0.0
    %1122 = vmatmul.mubr.f32.gmra.mrb[0].mxu0 %v1049
    %v1123 = vpop.f32.mrb[0].mxu0
    %v1124 = vadd.f32 %v1040, %v1123
    %v1125 = vpop.f32.mrb[0].mxu0
    %1126 = vmatprep.mubr.f32.mxu0 0.0
    %1127 = vmatmul.mubr.f32.gmra.mrb[0].mxu0 %v1052
    %v1128 = vpop.f32.mrb[0].mxu0
    %v1129 = vadd.f32 %v1045, %v1128
    %v1130 = vpop.f32.mrb[0].mxu0
    %1131 = vdwg.mxu0
    %v1132 = vmul.f32 %v1124, %v1035
    %v1133 = vmul.f32 %v1129, %v1036
    %1134 = vst [vmem:[#allocation6] sm:$0xff] %v1132
    %1135 = vst [vmem:[#allocation6 + $0x8] sm:$0x3] %v1133
    %v1136 = vld [vmem:[%s2 + $0x8] sm:$0xff]
    %v1137 = vld [vmem:[%s2 + $0x10] sm:$0xff]
    %v1138 = vld [vmem:[%s2 + $0x18] sm:$0xff]
    %v1139 = vld [vmem:[%s2 + $0x20] sm:$0xff]
    %v1140 = vld [vmem:[%s2 + $0x38] sm:$0x1]
    %v1141 = vld [vmem:[%s4 + $0x10] sm:$0xff]
    %v1142 = vld [vmem:[%s4 + $0x18] sm:$0xff]
    %v1143 = vld [vmem:[%s4 + $0x20] sm:$0xff]
    %v1144 = vld [vmem:[%s4 + $0x28] sm:$0xff]
    %v1145 = vld [vmem:[%s4 + $0x30] sm:$0xff]
    %v1146 = vld [vmem:[%s4 + $0x38] sm:$0x3]
    %s1147 = sld [smem:[#allocation2]]
    %s1148 = sld [smem:[#allocation2 + $0x1]]
    %v1149 = vadd.f32 %v231, %v1136
    %v1150 = vadd.f32 %v232, %v1137
    %v1151 = vadd.f32 %v233, %v1138
    %v1152 = vadd.f32 %v234, %v1139
    %1154 = vset.pattern.permute.xlu0 0
    %1155 = vperm.xlu0 %1154, %v1141
    %v1156 = vpop.permute.xlu0 %1155
    %1159 = vset.pattern.permute.xlu0 0
    %1160 = vperm.xlu0 %1159, %v1142
    %v1161 = vpop.permute.xlu0 %1160
    %1164 = vset.pattern.permute.xlu0 0
    %1165 = vperm.xlu0 %1164, %v1143
    %v1166 = vpop.permute.xlu0 %1165
    %1169 = vset.pattern.permute.xlu0 0
    %1170 = vperm.xlu0 %1169, %v1144
    %v1171 = vpop.permute.xlu0 %1170
    %v1173 = vmul.f32 %v1149, %v1156
    %v1174 = vmul.f32 %v1150, %v1161
    %v1175 = vmul.f32 %v1151, %v1166
    %v1176 = vmul.f32 %v1152, %v1171
    %v1177 = vadd.f32 %v1173, %v1174
    %v1178 = vadd.f32 %v1177, %v1175
    %v1179 = vadd.f32 %v1178, %v1176
    %v1180 = vrot.slane %v1179, 4
    %v1181 = vadd.f32 %v1179, %v1180
    %v1182 = vrot.slane %v1181, 2
    %v1183 = vadd.f32 %v1181, %v1182
    %v1184 = vrot.slane %v1183, 1
    %v1185 = vadd.f32 %v1183, %v1184
    %1187 = vset.pattern.permute.xlu0 0
    %1188 = vperm.xlu0 %1187, %v1145
    %v1189 = vpop.permute.xlu0 %1188
    %1192 = vset.pattern.permute.xlu0 0
    %1193 = vperm.xlu0 %1192, %v1146
    %v1194 = vpop.permute.xlu0 %1193
    %v1196 = vmul.f32 %v1132, %v1189
    %v1197 = vmul.f32 %v1133, %v1194
    %v1198 = vsel %vm754, %v1197, 0.0
    %v1199 = vadd.f32 %v1196, %v1198
    %v1200 = vrot.slane %v1199, 4
    %v1201 = vadd.f32 %v1199, %v1200
    %v1202 = vrot.slane %v1201, 2
    %v1203 = vadd.f32 %v1201, %v1202
    %v1204 = vrot.slane %v1203, 1
    %v1205 = vadd.f32 %v1203, %v1204
    %v1206 = vadd.f32 %v1185, %v1205
    %v1207 = vstv %s1147
    %v1208 = vmul.f32 %v1140, %v1207
    %v1209 = vadd.f32 %v1206, %v1208
    %v1210 = vstv %s1148
    %v1211 = vadd.f32 %v1209, %v1210
    %1212 = vst [vmem:[#allocation5] sm:$0x1] %v1211
    // Predicated region
    $region30: #{tpu_custom_call.1} parent=1 // pred_check
      _
    $region31: #{tpu_custom_call.1} parent=1 // pred_check_branch
      %1214 = sbr.rel (0) target = $region33
    $region32: #{tpu_custom_call.1} parent=1 // pred_region
      %s1216 = ssub.s32 16, 16
      %1217 = vsyncadd [#allocation3], %s1216
      %s1219 = sshll.u32 [#allocation5], 4
      %s1220 = int_to_ptr.vmem [resolvable:$true] %s1219
      %1222 = dma.vmem_to_hbm [thread:$0]  %s1220, 16, %s6, [#allocation3]
    $region33: #{tpu_custom_call.1} parent=1 // pred_fallthru
      _
    // Predicated region
    $region34: #{tpu_custom_call.1} parent=1 // pred_check
      _
    $region35: #{tpu_custom_call.1} parent=1 // pred_check_branch
      %1224 = sbr.rel (0) target = $region37
    $region36: #{tpu_custom_call.1} parent=1 // pred_region
      %s1226 = ssub.s32 256, 256
      %1227 = vsyncadd [#allocation7], %s1226
      %s1228 = sshll.u32 [#allocation6], 4
      %s1229 = int_to_ptr.vmem [resolvable:$true] %s1228
      %1234 = dma.vmem_to_hbm [thread:$0]  %s1229, 256, %s7, [#allocation7], 128, 128, 8
    $region37: #{tpu_custom_call.1} parent=1 // pred_fallthru
      _
    // Predicated region
    $region38: #{tpu_custom_call.1} parent=1 // pred_check
      _
    $region39: #{tpu_custom_call.1} parent=1 // pred_check_branch
      %1236 = sbr.rel (0) target = $region41
    $region40: #{tpu_custom_call.1} parent=1 // pred_region
      %1237 = dma.done [#allocation3], 16
    $region41: #{tpu_custom_call.1} parent=1 // pred_fallthru
      _
    // Predicated region
    $region42: #{tpu_custom_call.1} parent=1 // pred_check
      _
    $region43: #{tpu_custom_call.1} parent=1 // pred_check_branch
      %1239 = sbr.rel (0) target = $region45
    $region44: #{tpu_custom_call.1} parent=1 // pred_region
      %1240 = dma.done [#allocation7], 256
    $region45: #{tpu_custom_call.1} parent=1 // pred_fallthru
      _
    %1241 = vsyncpa [#allocation3], 1
    %1242 = vsyncpa [#allocation7], 1
    %1243 = vsyncpa [#allocation4], 1

</llo_original>
